<compile_context>
chip_gen: v7x
topology: tpu7x:2x2x1
jax: 0.10.0
libtpu: 0.0.40
codegen_flags: <defaults>
</compile_context>

<pallas_src>
import functools

import jax
import jax.numpy as jnp
from jax.experimental import pallas as pl
from jax.experimental.pallas import tpu as pltpu

_LANE = 128
_ABS_MAX_TILE = 64 * 1024          # hard cap on lanes per grid step
_VMEM_BUDGET = 10 * 2**20          # double-buffered inputs + accumulators budget


def _sublane_pack(d):
    """Largest 2^k <= 8 dividing d; splits H*W into (sub, d//sub) for free."""
    for s in (8, 4, 2):
        if d % s == 0:
            return s
    return 1


def _largest_divisor_leq(n, cap):
    cap = max(1, min(n, cap))
    for k in range(cap, 0, -1):
        if n % k == 0:
            return k
    return 1


def _plan_tiles(n, dp, sub, in_itemsizes, n_acc, max_tile):
    """Pick (batch_block nb, lane_tile, vmem_limit_bytes) under a VMEM budget.

    VMEM model: 2 buffers per input block (nb, sub, tile) plus n_acc f32
    (sub, tile) accumulators.  Tile is a multiple of 128 (or the full extent),
    so block shapes always satisfy the (8, 128) / full-dim rule.
    """
    in_lane = 2 * sum(in_itemsizes) * sub      # bytes/lane per batch row, x2 buffers
    acc_lane = n_acc * 4 * sub                 # bytes/lane, f32 accumulators
    budget_lanes = max(_LANE, _VMEM_BUDGET // (in_lane + acc_lane))
    tile = min(_ABS_MAX_TILE, (budget_lanes // _LANE) * _LANE)
    if max_tile is not None:
        tile = min(tile, max(_LANE, (max_tile // _LANE) * _LANE))
    nb = 1
    if dp <= tile:
        # Whole (sub, dp) row fits in one tile: widen the batch block instead
        # so each grid step still carries a large DMA payload.
        tile = dp
        nb_cap = max(1, (_VMEM_BUDGET - acc_lane * tile) // max(in_lane * tile, 1))
        nb = _largest_divisor_leq(n, nb_cap)
    vmem_need = in_lane * nb * tile + acc_lane * tile + 4 * 8 * _LANE
    vmem_limit = int(min(64 * 2**20, max(16 * 2**20, 2 * vmem_need)))
    return nb, tile, vmem_limit


def _first2_class_sums(logits, targets, max_tile):
    """[sum(targets), sum(logits), sum(logits*targets)] for classes 0 and 1.

    Returns f32 array of shape (2, 3).
    """
    n, c, h, w = logits.shape
    d = h * w
    sub = _sublane_pack(d)
    dp = d // sub
    # Free row-major views (no HBM copy): (N, C, H, W) -> (N, C, sub, dp).
    x = logits.reshape(n, c, sub, dp)
    t = targets.reshape(n, c, sub, dp)

    x_isz = jnp.dtype(logits.dtype).itemsize
    t_isz = jnp.dtype(targets.dtype).itemsize
    nb, tile, vmem_limit = _plan_tiles(n, dp, sub, (x_isz, t_isz), 3, max_tile)
    n_tiles = pl.cdiv(dp, tile)
    ragged = (dp % tile) != 0            # only then does the last tile overhang

    def kernel(x_ref, t_ref, out_ref, acc_t, acc_l, acc_xt):
        ni = pl.program_id(1)
        di = pl.program_id(2)

        @pl.when(jnp.logical_and(ni == 0, di == 0))
        def _init():
            acc_t[...] = jnp.zeros_like(acc_t)
            acc_l[...] = jnp.zeros_like(acc_l)
            acc_xt[...] = jnp.zeros_like(acc_xt)

        xv = x_ref[...].astype(jnp.float32)      # (nb, sub, tile)
        tv = t_ref[...].astype(jnp.float32)
        if ragged:
            lane = jax.lax.broadcasted_iota(jnp.int32, (sub, tile), 1)
            valid = (di * tile + lane) < dp
            xv = jnp.where(valid, xv, 0.0)
            tv = jnp.where(valid, tv, 0.0)
        # Hot loop: pure VPU adds/muls into sublane/lane-dense accumulators.
        acc_t[...] += jnp.sum(tv, axis=0)
        acc_l[...] += jnp.sum(xv, axis=0)
        acc_xt[...] += jnp.sum(xv * tv, axis=0)

        @pl.when(jnp.logical_and(ni == pl.num_programs(1) - 1,
                                 di == pl.num_programs(2) - 1))
        def _finalize():
            # Cross-sublane/lane reduction exactly once per class; lane-dense store.
            out_ref[0:1, :] = jnp.broadcast_to(jnp.sum(acc_t[...]), (1, _LANE))
            out_ref[1:2, :] = jnp.broadcast_to(jnp.sum(acc_l[...]), (1, _LANE))
            out_ref[2:3, :] = jnp.broadcast_to(jnp.sum(acc_xt[...]), (1, _LANE))

    out = pl.pallas_call(
        kernel,
        out_shape=jax.ShapeDtypeStruct((2, 3, _LANE), jnp.float32),
        grid_spec=pltpu.PrefetchScalarGridSpec(
            num_scalar_prefetch=0,
            grid=(2, n // nb, n_tiles),
            in_specs=[
                pl.BlockSpec((nb, None, sub, tile),
                             lambda ci, ni, di: (ni, ci, 0, di)),
                pl.BlockSpec((nb, None, sub, tile),
                             lambda ci, ni, di: (ni, ci, 0, di)),
            ],
            out_specs=pl.BlockSpec((None, 3, _LANE),
                                   lambda ci, ni, di: (ci, 0, 0)),
            scratch_shapes=[pltpu.VMEM((sub, tile), jnp.float32)] * 3,
        ),
        compiler_params=pltpu.CompilerParams(
            dimension_semantics=("parallel", "arbitrary", "arbitrary"),
            vmem_limit_bytes=vmem_limit,
        ),
    )(x, t)
    return out[:, :, 0]                  # (2, 3)


def _extra_class_target_sums(targets, max_tile):
    """sum(targets) per class for classes 2..C-1 (logits never read)."""
    n, c, h, w = targets.shape
    c_extra = c - 2
    d = h * w
    sub = _sublane_pack(d)
    dp = d // sub
    t = targets.reshape(n, c, sub, dp)

    t_isz = jnp.dtype(targets.dtype).itemsize
    nb, tile, vmem_limit = _plan_tiles(n, dp, sub, (t_isz,), 1, max_tile)
    n_tiles = pl.cdiv(dp, tile)
    ragged = (dp % tile) != 0

    def kernel(t_ref, out_ref, acc):
        ni = pl.program_id(1)
        di = pl.program_id(2)

        @pl.when(jnp.logical_and(ni == 0, di == 0))
        def _init():
            acc[...] = jnp.zeros_like(acc)

        tv = t_ref[...].astype(jnp.float32)      # (nb, sub, tile)
        if ragged:
            lane = jax.lax.broadcasted_iota(jnp.int32, (sub, tile), 1)
            tv = jnp.where((di * tile + lane) < dp, tv, 0.0)
        acc[...] += jnp.sum(tv, axis=0)

        @pl.when(jnp.logical_and(ni == pl.num_programs(1) - 1,
                                 di == pl.num_programs(2) - 1))
        def _finalize():
            out_ref[...] = jnp.broadcast_to(jnp.sum(acc[...]), (1, _LANE))

    out = pl.pallas_call(
        kernel,
        out_shape=jax.ShapeDtypeStruct((c_extra, 1, _LANE), jnp.float32),
        grid_spec=pltpu.PrefetchScalarGridSpec(
            num_scalar_prefetch=0,
            grid=(c_extra, n // nb, n_tiles),
            in_specs=[
                # index_map offsets the class axis by 2: classes 0/1 are never
                # re-read here and no HBM slice copy of targets is made.
                pl.BlockSpec((nb, None, sub, tile),
                             lambda ci, ni, di: (ni, ci + 2, 0, di)),
            ],
            out_specs=pl.BlockSpec((None, 1, _LANE),
                                   lambda ci, ni, di: (ci, 0, 0)),
            scratch_shapes=[pltpu.VMEM((sub, tile), jnp.float32)],
        ),
        compiler_params=pltpu.CompilerParams(
            dimension_semantics=("parallel", "arbitrary", "arbitrary"),
            vmem_limit_bytes=vmem_limit,
        ),
    )(t)
    return out[:, 0, 0]                  # (C-2,)


@functools.partial(jax.jit, static_argnames=("max_tile",))
def weight_dice_loss(logits, targets, max_tile=None):
    """WeightDiceLoss forward.  logits/targets: (N, C, H, W), C >= 2.

    `max_tile` (static) optionally caps the lane-tile (used in tests to force
    the ragged-tail masking path); leave None in production.
    """
    if logits.ndim != 4 or targets.shape != logits.shape:
        raise ValueError("expected matching (N, C, H, W) inputs")
    c = logits.shape[1]
    if c < 2:
        raise ValueError("WeightDiceLoss requires at least 2 classes")

    sums = _first2_class_sums(logits, targets, max_tile)     # (2, 3) f32
    eps = jnp.float32(1e-8)
    num01, sum_l01, sum_xt01 = sums[:, 0], sums[:, 1], sums[:, 2]

    total_targets = jnp.sum(num01)
    if c > 2:   # num_sum runs over ALL classes in the reference module
        total_targets = total_targets + jnp.sum(
            _extra_class_target_sums(targets, max_tile))

    # Hard-coded 2-class weighting, exactly as in the PyTorch module.
    w = (total_targets + eps) / (num01 + eps)
    w = w / jnp.sum(w)
    dice = w * (2.0 * sum_xt01 + eps) / (sum_l01 + num01 + eps)
    return jnp.float32(1.0) - jnp.sum(dice) / jnp.float32(c)


def _reference(logits, targets):
    """Pure-JAX mirror of the PyTorch forward (f32 accumulation)."""
    c = logits.shape[1]
    eps = 1e-8
    lf = logits.astype(jnp.float32)
    tf = targets.astype(jnp.float32)
    num_sum = jnp.sum(tf, axis=(0, 2, 3))
    w = (jnp.sum(num_sum) + eps) / (num_sum[:2] + eps)
    w = w / jnp.sum(w)
    dice_sum = 0.0
    for i in range(2):
        inter = jnp.sum(lf[:, i] * tf[:, i])
        union = jnp.sum(lf[:, i]) + jnp.sum(tf[:, i])
        dice_sum = dice_sum + w[i] * (2.0 * inter + eps) / (union + eps)
    return 1.0 - dice_sum / c


if __name__ == "__main__":
    key = jax.random.PRNGKey(0)

    def check(n, c, h, w, max_tile=None, dtype=jnp.float32):
        k1, k2 = jax.random.split(jax.random.fold_in(key, n * 10000 + c * 1000 + h))
        logits = jax.random.uniform(k1, (n, c, h, w), dtype=jnp.float32).astype(dtype)
        targets = (jax.random.uniform(k2, (n, c, h, w)) > 0.5).astype(dtype)
        loss = weight_dice_loss(logits, targets, max_tile=max_tile)
        jax.block_until_ready(loss)
        ref = _reference(logits, targets)
        assert jnp.allclose(loss, ref, atol=1e-5, rtol=1e-4), (n, c, h, w, loss, ref)

    check(2, 4, 16, 16)                      # C>2: extra-class (targets-only) kernel
    check(2, 2, 48, 48, max_tile=128)        # forced small tile: ragged-tail masking
    check(2, 3, 7, 9)                        # odd H*W: sublane-pack < 8 path
    check(2, 2, 32, 32, dtype=jnp.bfloat16)  # narrow-dtype inputs, f32 accumulation

    print("KERNEL_OK")
</pallas_src>

<mosaic_0001>
module attributes {stable_mosaic.version = 11 : i64} {
  func.func @kernel(%arg0: i32, %arg1: i32, %arg2: i32, %arg3: memref<2x1x8x32xf32, #tpu.memory_space<vmem>>, %arg4: memref<2x1x8x32xf32, #tpu.memory_space<vmem>>, %arg5: memref<1x3x128xf32, #tpu.memory_space<vmem>>, %arg6: memref<8x32xf32, #tpu.memory_space<vmem>>, %arg7: memref<8x32xf32, #tpu.memory_space<vmem>>, %arg8: memref<8x32xf32, #tpu.memory_space<vmem>>) attributes {dimension_semantics = [#tpu.dimension_semantics<parallel>, #tpu.dimension_semantics<arbitrary>, #tpu.dimension_semantics<arbitrary>], iteration_bounds = array<i64: 2, 1, 1>, scalar_prefetch = 0 : i64, scratch_operands = 3 : i64, tpu.core_type = #tpu.core_type<tc>, window_params = [{transform_indices = @transform_0, window_bounds = array<i64: 2, 1, 8, 32>}, {transform_indices = @transform_1, window_bounds = array<i64: 2, 1, 8, 32>}, {transform_indices = @transform_2, window_bounds = array<i64: 1, 3, 128>}]} {
    %c0_i32 = arith.constant 0 : i32
    %0 = arith.cmpi eq, %arg1, %c0_i32 : i32
    %c0_i32_0 = arith.constant 0 : i32
    %1 = arith.cmpi eq, %arg2, %c0_i32_0 : i32
    %2 = arith.andi %0, %1 : i1
    %3 = arith.extui %2 : i1 to i32
    %c0_i32_1 = arith.constant 0 : i32
    %4 = arith.cmpi ne, %3, %c0_i32_1 : i32
    scf.if %4 {
      %cst_26 = arith.constant 0.000000e+00 : f32
      %27 = vector.broadcast %cst_26 : f32 to vector<8x32xf32>
      %c0_27 = arith.constant 0 : index
      %c0_28 = arith.constant 0 : index
      %28 = vector.load %arg6[%c0_27, %c0_28] : memref<8x32xf32, #tpu.memory_space<vmem>>, vector<8x32xf32>
      tpu.vector_store %arg6[%c0_27, %c0_28], %27 {strides = array<i32>} : memref<8x32xf32, #tpu.memory_space<vmem>>, vector<8x32xf32>,
      %cst_29 = arith.constant 0.000000e+00 : f32
      %29 = vector.broadcast %cst_29 : f32 to vector<8x32xf32>
      %c0_30 = arith.constant 0 : index
      %c0_31 = arith.constant 0 : index
      %30 = vector.load %arg7[%c0_30, %c0_31] : memref<8x32xf32, #tpu.memory_space<vmem>>, vector<8x32xf32>
      tpu.vector_store %arg7[%c0_30, %c0_31], %29 {strides = array<i32>} : memref<8x32xf32, #tpu.memory_space<vmem>>, vector<8x32xf32>,
      %cst_32 = arith.constant 0.000000e+00 : f32
      %31 = vector.broadcast %cst_32 : f32 to vector<8x32xf32>
      %c0_33 = arith.constant 0 : index
      %c0_34 = arith.constant 0 : index
      %32 = vector.load %arg8[%c0_33, %c0_34] : memref<8x32xf32, #tpu.memory_space<vmem>>, vector<8x32xf32>
      tpu.vector_store %arg8[%c0_33, %c0_34], %31 {strides = array<i32>} : memref<8x32xf32, #tpu.memory_space<vmem>>, vector<8x32xf32>,
    } else {
    }
    %c0 = arith.constant 0 : index
    %c0_2 = arith.constant 0 : index
    %c0_3 = arith.constant 0 : index
    %c0_4 = arith.constant 0 : index
    %5 = vector.load %arg3[%c0, %c0_2, %c0_3, %c0_4] : memref<2x1x8x32xf32, #tpu.memory_space<vmem>>, vector<2x1x8x32xf32>
    %6 = vector.shape_cast %5 : vector<2x1x8x32xf32> to vector<2x8x32xf32>
    %c0_5 = arith.constant 0 : index
    %c0_6 = arith.constant 0 : index
    %c0_7 = arith.constant 0 : index
    %c0_8 = arith.constant 0 : index
    %7 = vector.load %arg4[%c0_5, %c0_6, %c0_7, %c0_8] : memref<2x1x8x32xf32, #tpu.memory_space<vmem>>, vector<2x1x8x32xf32>
    %8 = vector.shape_cast %7 : vector<2x1x8x32xf32> to vector<2x8x32xf32>
    %c0_9 = arith.constant 0 : index
    %c0_10 = arith.constant 0 : index
    %9 = vector.load %arg6[%c0_9, %c0_10] : memref<8x32xf32, #tpu.memory_space<vmem>>, vector<8x32xf32>
    %cst = arith.constant dense<0.000000e+00> : vector<8x32xf32>
    %10 = vector.multi_reduction <add>, %8, %cst [0] : vector<2x8x32xf32> to vector<8x32xf32>
    %11 = arith.addf %9, %10 : vector<8x32xf32>
    %c0_11 = arith.constant 0 : index
    %c0_12 = arith.constant 0 : index
    %12 = vector.load %arg6[%c0_11, %c0_12] : memref<8x32xf32, #tpu.memory_space<vmem>>, vector<8x32xf32>
    tpu.vector_store %arg6[%c0_11, %c0_12], %11 {strides = array<i32>} : memref<8x32xf32, #tpu.memory_space<vmem>>, vector<8x32xf32>,
    %c0_13 = arith.constant 0 : index
    %c0_14 = arith.constant 0 : index
    %13 = vector.load %arg7[%c0_13, %c0_14] : memref<8x32xf32, #tpu.memory_space<vmem>>, vector<8x32xf32>
    %cst_15 = arith.constant dense<0.000000e+00> : vector<8x32xf32>
    %14 = vector.multi_reduction <add>, %6, %cst_15 [0] : vector<2x8x32xf32> to vector<8x32xf32>
    %15 = arith.addf %13, %14 : vector<8x32xf32>
    %c0_16 = arith.constant 0 : index
    %c0_17 = arith.constant 0 : index
    %16 = vector.load %arg7[%c0_16, %c0_17] : memref<8x32xf32, #tpu.memory_space<vmem>>, vector<8x32xf32>
    tpu.vector_store %arg7[%c0_16, %c0_17], %15 {strides = array<i32>} : memref<8x32xf32, #tpu.memory_space<vmem>>, vector<8x32xf32>,
    %c0_18 = arith.constant 0 : index
    %c0_19 = arith.constant 0 : index
    %17 = vector.load %arg8[%c0_18, %c0_19] : memref<8x32xf32, #tpu.memory_space<vmem>>, vector<8x32xf32>
    %18 = arith.mulf %6, %8 : vector<2x8x32xf32>
    %cst_20 = arith.constant dense<0.000000e+00> : vector<8x32xf32>
    %19 = vector.multi_reduction <add>, %18, %cst_20 [0] : vector<2x8x32xf32> to vector<8x32xf32>
    %20 = arith.addf %17, %19 : vector<8x32xf32>
    %c0_21 = arith.constant 0 : index
    %c0_22 = arith.constant 0 : index
    %21 = vector.load %arg8[%c0_21, %c0_22] : memref<8x32xf32, #tpu.memory_space<vmem>>, vector<8x32xf32>
    tpu.vector_store %arg8[%c0_21, %c0_22], %20 {strides = array<i32>} : memref<8x32xf32, #tpu.memory_space<vmem>>, vector<8x32xf32>,
    %c0_i32_23 = arith.constant 0 : i32
    %22 = arith.cmpi eq, %arg1, %c0_i32_23 : i32
    %c0_i32_24 = arith.constant 0 : i32
    %23 = arith.cmpi eq, %arg2, %c0_i32_24 : i32
    %24 = arith.andi %22, %23 : i1
    %25 = arith.extui %24 : i1 to i32
    %c0_i32_25 = arith.constant 0 : i32
    %26 = arith.cmpi ne, %25, %c0_i32_25 : i32
    scf.if %26 {
      %c0_26 = arith.constant 0 : index
      %c0_27 = arith.constant 0 : index
      %27 = vector.load %arg6[%c0_26, %c0_27] : memref<8x32xf32, #tpu.memory_space<vmem>>, vector<8x32xf32>
      %28 = vector.shape_cast %27 : vector<8x32xf32> to vector<1x8x32xf32>
      %cst_28 = arith.constant dense<0.000000e+00> : vector<1xf32>
      %29 = vector.multi_reduction <add>, %28, %cst_28 [1, 2] : vector<1x8x32xf32> to vector<1xf32>
      %30 = vector.shape_cast %29 : vector<1xf32> to vector<1x1x1xf32>
      %31 = vector.extract %30[0, 0, 0] : f32 from vector<1x1x1xf32>
      %32 = vector.broadcast %31 : f32 to vector<1x128xf32>
      %c0_29 = arith.constant 0 : index
      %c0_30 = arith.constant 0 : index
      %c0_31 = arith.constant 0 : index
      %33 = vector.load %arg5[%c0_29, %c0_30, %c0_31] : memref<1x3x128xf32, #tpu.memory_space<vmem>>, vector<1x1x128xf32>
      %34 = vector.shape_cast %33 : vector<1x1x128xf32> to vector<1x128xf32>
      %35 = vector.shape_cast %32 : vector<1x128xf32> to vector<1x1x128xf32>
      tpu.vector_store %arg5[%c0_29, %c0_30, %c0_31], %35 {strides = array<i32>} : memref<1x3x128xf32, #tpu.memory_space<vmem>>, vector<1x1x128xf32>,
      %c0_32 = arith.constant 0 : index
      %c0_33 = arith.constant 0 : index
      %36 = vector.load %arg7[%c0_32, %c0_33] : memref<8x32xf32, #tpu.memory_space<vmem>>, vector<8x32xf32>
      %37 = vector.shape_cast %36 : vector<8x32xf32> to vector<1x8x32xf32>
      %cst_34 = arith.constant dense<0.000000e+00> : vector<1xf32>
      %38 = vector.multi_reduction <add>, %37, %cst_34 [1, 2] : vector<1x8x32xf32> to vector<1xf32>
      %39 = vector.shape_cast %38 : vector<1xf32> to vector<1x1x1xf32>
      %40 = vector.extract %39[0, 0, 0] : f32 from vector<1x1x1xf32>
      %41 = vector.broadcast %40 : f32 to vector<1x128xf32>
      %c0_35 = arith.constant 0 : index
      %c1 = arith.constant 1 : index
      %c0_36 = arith.constant 0 : index
      %42 = vector.load %arg5[%c0_35, %c1, %c0_36] : memref<1x3x128xf32, #tpu.memory_space<vmem>>, vector<1x1x128xf32>
      %43 = vector.shape_cast %42 : vector<1x1x128xf32> to vector<1x128xf32>
      %44 = vector.shape_cast %41 : vector<1x128xf32> to vector<1x1x128xf32>
      tpu.vector_store %arg5[%c0_35, %c1, %c0_36], %44 {strides = array<i32>} : memref<1x3x128xf32, #tpu.memory_space<vmem>>, vector<1x1x128xf32>,
      %c0_37 = arith.constant 0 : index
      %c0_38 = arith.constant 0 : index
      %45 = vector.load %arg8[%c0_37, %c0_38] : memref<8x32xf32, #tpu.memory_space<vmem>>, vector<8x32xf32>
      %46 = vector.shape_cast %45 : vector<8x32xf32> to vector<1x8x32xf32>
      %cst_39 = arith.constant dense<0.000000e+00> : vector<1xf32>
      %47 = vector.multi_reduction <add>, %46, %cst_39 [1, 2] : vector<1x8x32xf32> to vector<1xf32>
      %48 = vector.shape_cast %47 : vector<1xf32> to vector<1x1x1xf32>
      %49 = vector.extract %48[0, 0, 0] : f32 from vector<1x1x1xf32>
      %50 = vector.broadcast %49 : f32 to vector<1x128xf32>
      %c0_40 = arith.constant 0 : index
      %c2 = arith.constant 2 : index
      %c0_41 = arith.constant 0 : index
      %51 = vector.load %arg5[%c0_40, %c2, %c0_41] : memref<1x3x128xf32, #tpu.memory_space<vmem>>, vector<1x1x128xf32>
      %52 = vector.shape_cast %51 : vector<1x1x128xf32> to vector<1x128xf32>
      %53 = vector.shape_cast %50 : vector<1x128xf32> to vector<1x1x128xf32>
      tpu.vector_store %arg5[%c0_40, %c2, %c0_41], %53 {strides = array<i32>} : memref<1x3x128xf32, #tpu.memory_space<vmem>>, vector<1x1x128xf32>,
    } else {
    }
    return
  }
  func.func @transform_0(%arg0: i32, %arg1: i32, %arg2: i32) -> (i32, i32, i32, i32) {
    %c0_i32 = arith.constant 0 : i32
    %c0_i32_0 = arith.constant 0 : i32
    return %arg1, %arg0, %c0_i32, %arg2 : i32, i32, i32, i32
  }
  func.func @transform_1(%arg0: i32, %arg1: i32, %arg2: i32) -> (i32, i32, i32, i32) {
    %c0_i32 = arith.constant 0 : i32
    %c0_i32_0 = arith.constant 0 : i32
    return %arg1, %arg0, %c0_i32, %arg2 : i32, i32, i32, i32
  }
  func.func @transform_2(%arg0: i32, %arg1: i32, %arg2: i32) -> (i32, i32, i32) {
    %c0_i32 = arith.constant 0 : i32
    %c0_i32_0 = arith.constant 0 : i32
    %c0_i32_1 = arith.constant 0 : i32
    return %arg0, %c0_i32, %c0_i32_0 : i32, i32, i32
  }
}

module attributes {stable_mosaic.version = 11 : i64} {
  func.func @kernel(%arg0: i32, %arg1: i32, %arg2: i32, %arg3: memref<2x1x8x32xf32, #tpu.memory_space<vmem>>, %arg4: memref<1x1x128xf32, #tpu.memory_space<vmem>>, %arg5: memref<8x32xf32, #tpu.memory_space<vmem>>) attributes {dimension_semantics = [#tpu.dimension_semantics<parallel>, #tpu.dimension_semantics<arbitrary>, #tpu.dimension_semantics<arbitrary>], iteration_bounds = array<i64: 2, 1, 1>, scalar_prefetch = 0 : i64, scratch_operands = 1 : i64, tpu.core_type = #tpu.core_type<tc>, window_params = [{transform_indices = @transform_0, window_bounds = array<i64: 2, 1, 8, 32>}, {transform_indices = @transform_1, window_bounds = array<i64: 1, 1, 128>}]} {
    %c0_i32 = arith.constant 0 : i32
    %0 = arith.cmpi eq, %arg1, %c0_i32 : i32
    %c0_i32_0 = arith.constant 0 : i32
    %1 = arith.cmpi eq, %arg2, %c0_i32_0 : i32
    %2 = arith.andi %0, %1 : i1
    %3 = arith.extui %2 : i1 to i32
    %c0_i32_1 = arith.constant 0 : i32
    %4 = arith.cmpi ne, %3, %c0_i32_1 : i32
    scf.if %4 {
      %cst_12 = arith.constant 0.000000e+00 : f32
      %16 = vector.broadcast %cst_12 : f32 to vector<8x32xf32>
      %c0_13 = arith.constant 0 : index
      %c0_14 = arith.constant 0 : index
      %17 = vector.load %arg5[%c0_13, %c0_14] : memref<8x32xf32, #tpu.memory_space<vmem>>, vector<8x32xf32>
      tpu.vector_store %arg5[%c0_13, %c0_14], %16 {strides = array<i32>} : memref<8x32xf32, #tpu.memory_space<vmem>>, vector<8x32xf32>,
    } else {
    }
    %c0 = arith.constant 0 : index
    %c0_2 = arith.constant 0 : index
    %c0_3 = arith.constant 0 : index
    %c0_4 = arith.constant 0 : index
    %5 = vector.load %arg3[%c0, %c0_2, %c0_3, %c0_4] : memref<2x1x8x32xf32, #tpu.memory_space<vmem>>, vector<2x1x8x32xf32>
    %6 = vector.shape_cast %5 : vector<2x1x8x32xf32> to vector<2x8x32xf32>
    %c0_5 = arith.constant 0 : index
    %c0_6 = arith.constant 0 : index
    %7 = vector.load %arg5[%c0_5, %c0_6] : memref<8x32xf32, #tpu.memory_space<vmem>>, vector<8x32xf32>
    %cst = arith.constant dense<0.000000e+00> : vector<8x32xf32>
    %8 = vector.multi_reduction <add>, %6, %cst [0] : vector<2x8x32xf32> to vector<8x32xf32>
    %9 = arith.addf %7, %8 : vector<8x32xf32>
    %c0_7 = arith.constant 0 : index
    %c0_8 = arith.constant 0 : index
    %10 = vector.load %arg5[%c0_7, %c0_8] : memref<8x32xf32, #tpu.memory_space<vmem>>, vector<8x32xf32>
    tpu.vector_store %arg5[%c0_7, %c0_8], %9 {strides = array<i32>} : memref<8x32xf32, #tpu.memory_space<vmem>>, vector<8x32xf32>,
    %c0_i32_9 = arith.constant 0 : i32
    %11 = arith.cmpi eq, %arg1, %c0_i32_9 : i32
    %c0_i32_10 = arith.constant 0 : i32
    %12 = arith.cmpi eq, %arg2, %c0_i32_10 : i32
    %13 = arith.andi %11, %12 : i1
    %14 = arith.extui %13 : i1 to i32
    %c0_i32_11 = arith.constant 0 : i32
    %15 = arith.cmpi ne, %14, %c0_i32_11 : i32
    scf.if %15 {
      %c0_12 = arith.constant 0 : index
      %c0_13 = arith.constant 0 : index
      %16 = vector.load %arg5[%c0_12, %c0_13] : memref<8x32xf32, #tpu.memory_space<vmem>>, vector<8x32xf32>
      %17 = vector.shape_cast %16 : vector<8x32xf32> to vector<1x8x32xf32>
      %cst_14 = arith.constant dense<0.000000e+00> : vector<1xf32>
      %18 = vector.multi_reduction <add>, %17, %cst_14 [1, 2] : vector<1x8x32xf32> to vector<1xf32>
      %19 = vector.shape_cast %18 : vector<1xf32> to vector<1x1x1xf32>
      %20 = vector.extract %19[0, 0, 0] : f32 from vector<1x1x1xf32>
      %21 = vector.broadcast %20 : f32 to vector<1x128xf32>
      %c0_15 = arith.constant 0 : index
      %c0_16 = arith.constant 0 : index
      %c0_17 = arith.constant 0 : index
      %22 = vector.load %arg4[%c0_15, %c0_16, %c0_17] : memref<1x1x128xf32, #tpu.memory_space<vmem>>, vector<1x1x128xf32>
      %23 = vector.shape_cast %22 : vector<1x1x128xf32> to vector<1x128xf32>
      %24 = vector.shape_cast %21 : vector<1x128xf32> to vector<1x1x128xf32>
      tpu.vector_store %arg4[%c0_15, %c0_16, %c0_17], %24 {strides = array<i32>} : memref<1x1x128xf32, #tpu.memory_space<vmem>>, vector<1x1x128xf32>,
    } else {
    }
    return
  }
  func.func @transform_0(%arg0: i32, %arg1: i32, %arg2: i32) -> (i32, i32, i32, i32) {
    %c2_i32 = arith.constant 2 : i32
    %0 = arith.addi %arg0, %c2_i32 : i32
    %c0_i32 = arith.constant 0 : i32
    %c0_i32_0 = arith.constant 0 : i32
    return %arg1, %0, %c0_i32, %arg2 : i32, i32, i32, i32
  }
  func.func @transform_1(%arg0: i32, %arg1: i32, %arg2: i32) -> (i32, i32, i32) {
    %c0_i32 = arith.constant 0 : i32
    %c0_i32_0 = arith.constant 0 : i32
    %c0_i32_1 = arith.constant 0 : i32
    return %arg0, %c0_i32, %c0_i32_0 : i32, i32, i32
  }
}

</mosaic_0001>

<llo_original>
// kernel: weight_dice_loss.2
$region0: #{weight_dice_loss.2}
  #allocation0 [shape = 'u32[]', space=smem, size = 0x4, offset = 0x4, fixed_abs, tag = 'smem constant byte address 0x4 - core index']
  #allocation1 [shape = 'u32[144,128]{1,0:T(1,128)}', space=vmem, size = 0x12000, scoped, tag = 'internal scratch']
  #allocation2 [shape = 'f32[8,32]{1,0:T(8,128)}', space=vmem, size = 0x1000, scoped, tag = 'scratch operand']
  #allocation3 [shape = 'f32[8,32]{1,0:T(8,128)}', space=vmem, size = 0x1000, scoped, tag = 'scratch operand']
  #allocation4 [shape = 'f32[8,32]{1,0:T(8,128)}', space=vmem, size = 0x1000, scoped, tag = 'scratch operand']
  %s0 = inlined_call_operand.vmem [shape: f32[2,4,8,32], index: 0, kind: input, shape index: {}]
  %s1 = inlined_call_operand.vmem [shape: f32[2,4,8,32], index: 1, kind: input, shape index: {}]
  %s2 = inlined_call_operand.vmem [shape: f32[2,3,128], index: 2, kind: output, shape index: {}]
  %s3 = sld [smem:[#allocation0]]
  $region125: #{weight_dice_loss.2} parent=0
    _
  %s5 = ssub.s32 1, %s3
  %s6 = scalar_select 0, %s5, %s3
  $region1: #{weight_dice_loss.2} parent=0
    #allocation5 [shape = 'u8[16384]{0}', space=vmem, size = 0x4000, scoped, tag = 'input window, operand 0']
    #allocation6 [shape = 'u8[16384]{0}', space=vmem, size = 0x4000, scoped, tag = 'input window, operand 1']
    loop: start=0, step=1, limit=4
    $region2: #{weight_dice_loss.2} parent=1 // loop_pre_header
      _
    $region3: #{weight_dice_loss.2} parent=1 // loop_header
      %s8 = sphi 0, %s12
      %p9 = scmp.ge.s32.totalorder %s8, 4
      %s15 = sphi 0, %s34
      %s16 = sphi 0, %s30
      %s17 = sphi 0, %s26
      %s18 = sphi 0, %s15
      %s19 = sphi 0, %s16
      %s20 = sphi 0, %s17
      %s21 = sphi 0, %s18
      %s22 = sphi 0, %s19
      %s23 = sphi 0, %s20
      %s41 = sphi 0, %s43
      %s44 = sphi 0, %s41
      %s45 = sphi 0, %s44
      %s61 = sphi 0, %s45
      %s71 = sphi 0, %s73
      %s74 = sphi 0, %s71
      %s75 = sphi 0, %s74
      %s91 = sphi 0, %s75
      %s97 = sphi 0, %s99
      %s100 = sphi 0, %s97
      %s101 = sphi 0, %s100
      %s117 = sphi 0, %s101
    $region4: #{weight_dice_loss.2} parent=1 // loop_header_branch
      %11 = sbr.rel (%p9) target = $region8
    $region5: #{weight_dice_loss.2} parent=1 // loop_body
      %s13 = ssub.s32 %s8, 1
      %s14 = ssub.s32 %s8, 2
      %s24 = sadd.s32 1, %s17
      %p25 = scmp.ge.s32.totalorder %s24, 1
      %s26 = scalar_select %p25, 0, %s24
      %s27 = sadd.s32 1, %s16
      %s28 = scalar_select %p25, %s27, %s16
      %p29 = scmp.ge.s32.totalorder %s28, 1
      %s30 = scalar_select %p29, 0, %s28
      %s31 = sadd.s32 1, %s15
      %s32 = scalar_select %p29, %s31, %s15
      %p33 = scmp.ge.s32.totalorder %s32, 2
      %s34 = scalar_select %p33, 0, %s32
      %s35 = ssub.s32 %s16, %s30
      %s36 = ssub.s32 %s15, %s34
      %s37 = sor.u32 %s35, %s36
      %s38 = ssub.s32 %s17, %s26
      %s39 = sor.u32 %s37, %s38
      %p40 = scmp.eq.s32.totalorder %s39, 0
      %s42 = sadd.s32 %s41, 1
      %s43 = scalar_select %p40, %s41, %s42
      %p46 = pneg %p40
      %p47 = scmp.eq.s32.totalorder %s8, 1
      %p48 = por %p46, %p47
      %p49 = scmp.ne.s32.totalorder %s41, %s44
      %p50 = scmp.eq.s32.totalorder %s8, 0
      %p51 = por %p49, %p50
      %p52 = scmp.ne.s32.totalorder %s41, %s44
      %p53 = scmp.eq.s32.totalorder %s13, 1
      %p54 = por %p52, %p53
      %p55 = scmp.ne.s32.totalorder %s44, %s45
      %p56 = scmp.eq.s32.totalorder %s13, 0
      %p57 = por %p55, %p56
      %p58 = scmp.ne.s32.totalorder %s44, %s45
      %p59 = scmp.eq.s32.totalorder %s14, 1
      %p60 = por %p58, %p59
      %p62 = scmp.ne.s32.totalorder %s45, %s61
      %p63 = scmp.eq.s32.totalorder %s14, 0
      %p64 = por %p62, %p63
      %s65 = ssub.s32 %s16, %s30
      %s66 = ssub.s32 %s15, %s34
      %s67 = sor.u32 %s65, %s66
      %s68 = ssub.s32 %s17, %s26
      %s69 = sor.u32 %s67, %s68
      %p70 = scmp.eq.s32.totalorder %s69, 0
      %s72 = sadd.s32 %s71, 1
      %s73 = scalar_select %p70, %s71, %s72
      %p76 = pneg %p70
      %p77 = scmp.eq.s32.totalorder %s8, 1
      %p78 = por %p76, %p77
      %p79 = scmp.ne.s32.totalorder %s71, %s74
      %p80 = scmp.eq.s32.totalorder %s8, 0
      %p81 = por %p79, %p80
      %p82 = scmp.ne.s32.totalorder %s71, %s74
      %p83 = scmp.eq.s32.totalorder %s13, 1
      %p84 = por %p82, %p83
      %p85 = scmp.ne.s32.totalorder %s74, %s75
      %p86 = scmp.eq.s32.totalorder %s13, 0
      %p87 = por %p85, %p86
      %p88 = scmp.ne.s32.totalorder %s74, %s75
      %p89 = scmp.eq.s32.totalorder %s14, 1
      %p90 = por %p88, %p89
      %p92 = scmp.ne.s32.totalorder %s75, %s91
      %p93 = scmp.eq.s32.totalorder %s14, 0
      %p94 = por %p92, %p93
      %s95 = ssub.s32 %s15, %s34
      %p96 = scmp.eq.s32.totalorder %s95, 0
      %s98 = sadd.s32 %s97, 1
      %s99 = scalar_select %p96, %s97, %s98
      %p102 = pneg %p96
      %p103 = scmp.eq.s32.totalorder %s8, 1
      %p104 = por %p102, %p103
      %p105 = scmp.ne.s32.totalorder %s97, %s100
      %p106 = scmp.eq.s32.totalorder %s8, 0
      %p107 = por %p105, %p106
      %p108 = scmp.ne.s32.totalorder %s97, %s100
      %p109 = scmp.eq.s32.totalorder %s13, 1
      %p110 = por %p108, %p109
      %p111 = scmp.ne.s32.totalorder %s100, %s101
      %p112 = scmp.eq.s32.totalorder %s13, 0
      %p113 = por %p111, %p112
      %p114 = scmp.ne.s32.totalorder %s100, %s101
      %p115 = scmp.eq.s32.totalorder %s14, 1
      %p116 = por %p114, %p115
      %p118 = scmp.ne.s32.totalorder %s101, %s117
      %p119 = scmp.eq.s32.totalorder %s14, 0
      %p120 = por %p118, %p119
      %p121 = scmp.le.s32.totalorder 1, %s8
      %p122 = scmp.lt.s32.totalorder %s8, 3
      %p123 = pnand %p121, %p122
      %p124 = pneg %p123
      // Predicated region
      $region9: #{weight_dice_loss.2} parent=5 // pred_check
        _
      $region10: #{weight_dice_loss.2} parent=5 // pred_check_branch
        %126 = sbr.rel (%p123) target = $region12
      $region11: #{weight_dice_loss.2} parent=5 // pred_region
        %s127 = ssub.s32 %s8, 1
      $region12: #{weight_dice_loss.2} parent=5 // pred_fallthru
        _
      %p128 = scmp.lt.s32.totalorder %s8, 2
      // Predicated region
      $region13: #{weight_dice_loss.2} parent=5 // pred_check
        %p129 = pneg %p128
      $region14: #{weight_dice_loss.2} parent=5 // pred_check_branch
        %131 = sbr.rel (%p129) target = $region16
      $region15: #{weight_dice_loss.2} parent=5 // pred_region
        // Predicated region
        $region17: #{weight_dice_loss.2} parent=15 // pred_check
          %p132 = pneg %p51
        $region18: #{weight_dice_loss.2} parent=15 // pred_check_branch
          %134 = sbr.rel (%p132) target = $region20
        $region19: #{weight_dice_loss.2} parent=15 // pred_region
          %s135 = sand.u32 %s41, 1
          %s136 = sand.u32 %s41, 1
          %s137 = smul.addr %s136, 16
          %s138 = scalar_lea.vmem [#allocation5], %s137
          %s139 = smul.u32 2, %s16
          %s140 = sadd.s32 %s17, %s15
          %s141 = smul.addr %s139, 4
          %s142 = sadd.s32 %s140, %s141
          %s143 = smul.addr %s142, 8
          %s144 = scalar_lea.vmem %s0, %s143
          // Predicated region
          $region21: #{weight_dice_loss.2} parent=19 // pred_check
            _
          $region22: #{weight_dice_loss.2} parent=19 // pred_check_branch
            %146 = sbr.rel (0) target = $region24
          $region23: #{weight_dice_loss.2} parent=19 // pred_region
            // Predicated region
            $region25: #{weight_dice_loss.2} parent=23 // pred_check
              _
            $region26: #{weight_dice_loss.2} parent=23 // pred_check_branch
              %148 = sbr.rel (0) target = $region28
            $region27: #{weight_dice_loss.2} parent=23 // pred_region
              // Predicated region
              $region40: #{weight_dice_loss.2} parent=27 // pred_check
                _
              $region41: #{weight_dice_loss.2} parent=27 // pred_check_branch
                %165 = sbr.rel (0) target = $region43
              $region42: #{weight_dice_loss.2} parent=27 // pred_region
                loop: start=0, step=1, limit=1
                $region44: #{weight_dice_loss.2} parent=42 // loop_pre_header
                  _
                $region45: #{weight_dice_loss.2} parent=42 // loop_header
                  %s167 = sphi 0, %s171
                  %p168 = scmp.ge.s32.totalorder %s167, 1
                  %s172 = sphi %s144, %s144
                  %s173 = sphi %s138, %s138
                $region46: #{weight_dice_loss.2} parent=42 // loop_header_branch
                  %170 = sbr.rel (%p168) target = $region50
                $region47: #{weight_dice_loss.2} parent=42 // loop_body
                  %v174 = vld [vmem:[%s172] sm:$0xff]
                  %175 = vst [vmem:[%s173] sm:$0xff] %v174
                  %v176 = vld [vmem:[%s172 + $0x20] sm:$0xff]
                  %177 = vst [vmem:[%s173 + $0x8] sm:$0xff] %v176
                $region48: #{weight_dice_loss.2} parent=42 // loop_footer
                  %s171 = sadd.s32 1, %s167
                $region49: #{weight_dice_loss.2} parent=42 // loop_footer_branch
                  %166 = sbr.rel target = $region45
                $region50: #{weight_dice_loss.2} parent=42 // loop_exit
                  _
              $region43: #{weight_dice_loss.2} parent=27 // pred_fallthru
                _
              // Predicated region
              $region51: #{weight_dice_loss.2} parent=27 // pred_check
                _
              $region52: #{weight_dice_loss.2} parent=27 // pred_check_branch
                %179 = sbr.rel target = $region54
              $region53: #{weight_dice_loss.2} parent=27 // pred_region
                _
              $region54: #{weight_dice_loss.2} parent=27 // pred_fallthru
                _
            $region28: #{weight_dice_loss.2} parent=23 // pred_fallthru
              _
            // Predicated region
            $region29: #{weight_dice_loss.2} parent=23 // pred_check
              _
            $region30: #{weight_dice_loss.2} parent=23 // pred_check_branch
              %150 = sbr.rel target = $region32
            $region31: #{weight_dice_loss.2} parent=23 // pred_region
              loop: start=0, step=1, limit=1
              $region33: #{weight_dice_loss.2} parent=31 // loop_pre_header
                _
              $region34: #{weight_dice_loss.2} parent=31 // loop_header
                %s153 = sphi 0, %s157
                %p154 = scmp.ge.s32.totalorder %s153, 1
                %s158 = sphi %s144, %s144
                %s159 = sphi %s138, %s138
              $region35: #{weight_dice_loss.2} parent=31 // loop_header_branch
                %156 = sbr.rel (%p154) target = $region39
              $region36: #{weight_dice_loss.2} parent=31 // loop_body
                %v160 = vld [vmem:[%s158] sm:$0xff]
                %161 = vst [vmem:[%s159] sm:$0xff] %v160
                %v162 = vld [vmem:[%s158 + $0x20] sm:$0xff]
                %163 = vst [vmem:[%s159 + $0x8] sm:$0xff] %v162
              $region37: #{weight_dice_loss.2} parent=31 // loop_footer
                %s157 = sadd.s32 1, %s153
              $region38: #{weight_dice_loss.2} parent=31 // loop_footer_branch
                %152 = sbr.rel target = $region34
              $region39: #{weight_dice_loss.2} parent=31 // loop_exit
                _
            $region32: #{weight_dice_loss.2} parent=23 // pred_fallthru
              _
          $region24: #{weight_dice_loss.2} parent=19 // pred_fallthru
            _
          %180 = vnop
        $region20: #{weight_dice_loss.2} parent=15 // pred_fallthru
          _
        // Predicated region
        $region55: #{weight_dice_loss.2} parent=15 // pred_check
          %p181 = pneg %p81
        $region56: #{weight_dice_loss.2} parent=15 // pred_check_branch
          %183 = sbr.rel (%p181) target = $region58
        $region57: #{weight_dice_loss.2} parent=15 // pred_region
          %s184 = sand.u32 %s71, 1
          %s185 = sand.u32 %s71, 1
          %s186 = smul.addr %s185, 16
          %s187 = scalar_lea.vmem [#allocation6], %s186
          %s188 = smul.u32 2, %s16
          %s189 = sadd.s32 %s17, %s15
          %s190 = smul.addr %s188, 4
          %s191 = sadd.s32 %s189, %s190
          %s192 = smul.addr %s191, 8
          %s193 = scalar_lea.vmem %s1, %s192
          // Predicated region
          $region59: #{weight_dice_loss.2} parent=57 // pred_check
            _
          $region60: #{weight_dice_loss.2} parent=57 // pred_check_branch
            %195 = sbr.rel (0) target = $region62
          $region61: #{weight_dice_loss.2} parent=57 // pred_region
            // Predicated region
            $region63: #{weight_dice_loss.2} parent=61 // pred_check
              _
            $region64: #{weight_dice_loss.2} parent=61 // pred_check_branch
              %197 = sbr.rel (0) target = $region66
            $region65: #{weight_dice_loss.2} parent=61 // pred_region
              // Predicated region
              $region78: #{weight_dice_loss.2} parent=65 // pred_check
                _
              $region79: #{weight_dice_loss.2} parent=65 // pred_check_branch
                %214 = sbr.rel (0) target = $region81
              $region80: #{weight_dice_loss.2} parent=65 // pred_region
                loop: start=0, step=1, limit=1
                $region82: #{weight_dice_loss.2} parent=80 // loop_pre_header
                  _
                $region83: #{weight_dice_loss.2} parent=80 // loop_header
                  %s216 = sphi 0, %s220
                  %p217 = scmp.ge.s32.totalorder %s216, 1
                  %s221 = sphi %s193, %s193
                  %s222 = sphi %s187, %s187
                $region84: #{weight_dice_loss.2} parent=80 // loop_header_branch
                  %219 = sbr.rel (%p217) target = $region88
                $region85: #{weight_dice_loss.2} parent=80 // loop_body
                  %v223 = vld [vmem:[%s221] sm:$0xff]
                  %224 = vst [vmem:[%s222] sm:$0xff] %v223
                  %v225 = vld [vmem:[%s221 + $0x20] sm:$0xff]
                  %226 = vst [vmem:[%s222 + $0x8] sm:$0xff] %v225
                $region86: #{weight_dice_loss.2} parent=80 // loop_footer
                  %s220 = sadd.s32 1, %s216
                $region87: #{weight_dice_loss.2} parent=80 // loop_footer_branch
                  %215 = sbr.rel target = $region83
                $region88: #{weight_dice_loss.2} parent=80 // loop_exit
                  _
              $region81: #{weight_dice_loss.2} parent=65 // pred_fallthru
                _
              // Predicated region
              $region89: #{weight_dice_loss.2} parent=65 // pred_check
                _
              $region90: #{weight_dice_loss.2} parent=65 // pred_check_branch
                %228 = sbr.rel target = $region92
              $region91: #{weight_dice_loss.2} parent=65 // pred_region
                _
              $region92: #{weight_dice_loss.2} parent=65 // pred_fallthru
                _
            $region66: #{weight_dice_loss.2} parent=61 // pred_fallthru
              _
            // Predicated region
            $region67: #{weight_dice_loss.2} parent=61 // pred_check
              _
            $region68: #{weight_dice_loss.2} parent=61 // pred_check_branch
              %199 = sbr.rel target = $region70
            $region69: #{weight_dice_loss.2} parent=61 // pred_region
              loop: start=0, step=1, limit=1
              $region71: #{weight_dice_loss.2} parent=69 // loop_pre_header
                _
              $region72: #{weight_dice_loss.2} parent=69 // loop_header
                %s202 = sphi 0, %s206
                %p203 = scmp.ge.s32.totalorder %s202, 1
                %s207 = sphi %s193, %s193
                %s208 = sphi %s187, %s187
              $region73: #{weight_dice_loss.2} parent=69 // loop_header_branch
                %205 = sbr.rel (%p203) target = $region77
              $region74: #{weight_dice_loss.2} parent=69 // loop_body
                %v209 = vld [vmem:[%s207] sm:$0xff]
                %210 = vst [vmem:[%s208] sm:$0xff] %v209
                %v211 = vld [vmem:[%s207 + $0x20] sm:$0xff]
                %212 = vst [vmem:[%s208 + $0x8] sm:$0xff] %v211
              $region75: #{weight_dice_loss.2} parent=69 // loop_footer
                %s206 = sadd.s32 1, %s202
              $region76: #{weight_dice_loss.2} parent=69 // loop_footer_branch
                %201 = sbr.rel target = $region72
              $region77: #{weight_dice_loss.2} parent=69 // loop_exit
                _
            $region70: #{weight_dice_loss.2} parent=61 // pred_fallthru
              _
          $region62: #{weight_dice_loss.2} parent=57 // pred_fallthru
            _
          %229 = vnop
        $region58: #{weight_dice_loss.2} parent=15 // pred_fallthru
          _
      $region16: #{weight_dice_loss.2} parent=5 // pred_fallthru
        _
      %p230 = scmp.le.s32.totalorder 1, %s8
      %p231 = scmp.lt.s32.totalorder %s8, 3
      %p232 = pnand %p230, %p231
      %p233 = pneg %p232
      // Predicated region
      $region93: #{weight_dice_loss.2} parent=5 // pred_check
        _
      $region94: #{weight_dice_loss.2} parent=5 // pred_check_branch
        %235 = sbr.rel (%p232) target = $region96
      $region95: #{weight_dice_loss.2} parent=5 // pred_region
        %s236 = ssub.s32 %s8, 1
        %s237 = sand.u32 %s44, 1
        %s238 = sand.u32 %s44, 1
        %s239 = smul.addr %s238, 16
        %s240 = scalar_lea.vmem [#allocation5], %s239
        // Predicated region
        $region97: #{weight_dice_loss.2} parent=95 // pred_check
          %p241 = pneg %p57
        $region98: #{weight_dice_loss.2} parent=95 // pred_check_branch
          %243 = sbr.rel (%p241) target = $region100
        $region99: #{weight_dice_loss.2} parent=95 // pred_region
          _
        $region100: #{weight_dice_loss.2} parent=95 // pred_fallthru
          _
        %s244 = sand.u32 %s74, 1
        %s245 = sand.u32 %s74, 1
        %s246 = smul.addr %s245, 16
        %s247 = scalar_lea.vmem [#allocation6], %s246
        // Predicated region
        $region101: #{weight_dice_loss.2} parent=95 // pred_check
          %p248 = pneg %p87
        $region102: #{weight_dice_loss.2} parent=95 // pred_check_branch
          %250 = sbr.rel (%p248) target = $region104
        $region103: #{weight_dice_loss.2} parent=95 // pred_region
          _
        $region104: #{weight_dice_loss.2} parent=95 // pred_fallthru
          _
        %s251 = sand.u32 %s44, 1
        %s252 = sand.u32 %s44, 1
        %s253 = smul.addr %s252, 16
        %s254 = scalar_lea.vmem [#allocation5], %s253
        %p255 = pneg %p57
        %p256 = pneg %p54
        %s257 = sand.u32 %s74, 1
        %s258 = sand.u32 %s74, 1
        %s259 = smul.addr %s258, 16
        %s260 = scalar_lea.vmem [#allocation6], %s259
        %p261 = pneg %p87
        %p262 = pneg %p84
        %p263 = pneg %p113
        %p264 = pneg %p110
        %p265 = scmp.lt.s32.totalorder %s18, 1
        %s266 = scalar_select %p265, %s18, 1
        %s267 = smul.addr %s266, 4
        %s268 = scalar_lea.vmem %s2, %s267
        %s269 = smul.u32 2, %s19
        %s270 = smul.u32 2, %s19
        %p271 = scmp.lt.s32.totalorder %s18, 1
        %s272 = scalar_select %p271, %s18, 1
        %s273 = smul.addr %s272, 4
        %s274 = scalar_lea.vmem %s2, %s273
        %p275 = scmp.eq.s32.totalorder %s19, 0
        %p276 = scmp.eq.s32.totalorder %s20, 0
        %p277 = pnand %p275, %p276
        %p278 = pneg %p277
        // Predicated region
        $region105: #{weight_dice_loss.2} parent=95 // pred_check
          _
        $region106: #{weight_dice_loss.2} parent=95 // pred_check_branch
          %280 = sbr.rel (%p277) target = $region108
        $region107: #{weight_dice_loss.2} parent=95 // pred_region
          %vm281 = vcmask 261120
          %282 = vst.msk [vmem:[#allocation2] sm:$0xff] %vm281, 0.0
          %283 = vst.msk [vmem:[#allocation3] sm:$0xff] %vm281, 0.0
          %284 = vst.msk [vmem:[#allocation4] sm:$0xff] %vm281, 0.0
        $region108: #{weight_dice_loss.2} parent=95 // pred_fallthru
          _
        %v285 = vld [vmem:[%s240] sm:$0xff]
        %v286 = vld [vmem:[%s240 + $0x8] sm:$0xff]
        %v287 = vld [vmem:[%s247] sm:$0xff]
        %v288 = vld [vmem:[%s247 + $0x8] sm:$0xff]
        %v289 = vld [vmem:[#allocation2] sm:$0xff]
        %vm290 = vcmask 261120
        %v291 = vsel %vm290, %v287, 0.0
        %v292 = vsel %vm290, %v288, 0.0
        %v293 = vadd.f32 %v291, %v292
        %v294 = vadd.f32 %v289, %v293
        %295 = vst.msk [vmem:[#allocation2] sm:$0xff] %vm290, %v294
        %v296 = vld [vmem:[#allocation3] sm:$0xff]
        %v297 = vsel %vm290, %v285, 0.0
        %v298 = vsel %vm290, %v286, 0.0
        %v299 = vadd.f32 %v297, %v298
        %v300 = vadd.f32 %v296, %v299
        %301 = vst.msk [vmem:[#allocation3] sm:$0xff] %vm290, %v300
        %v302 = vld [vmem:[#allocation4] sm:$0xff]
        %v303 = vmul.f32 %v285, %v287
        %v304 = vmul.f32 %v286, %v288
        %v305 = vsel %vm290, %v303, 0.0
        %v306 = vsel %vm290, %v304, 0.0
        %v307 = vadd.f32 %v305, %v306
        %v308 = vadd.f32 %v302, %v307
        %309 = vst.msk [vmem:[#allocation4] sm:$0xff] %vm290, %v308
        // Predicated region
        $region109: #{weight_dice_loss.2} parent=95 // pred_check
          _
        $region110: #{weight_dice_loss.2} parent=95 // pred_check_branch
          %311 = sbr.rel (%p277) target = $region112
        $region111: #{weight_dice_loss.2} parent=95 // pred_region
          %v312 = vld [vmem:[#allocation2] sm:$0xff]
          %v313 = vsel %vm290, %v312, 0.0
          %314 = vadd.xlane.f32.xlu0 %v313
          %v315 = vpop.xlane.xlu0 %314
          %v316 = vrot.slane %v315, 4
          %v317 = vadd.f32 %v315, %v316
          %v318 = vrot.slane %v317, 2
          %v319 = vadd.f32 %v317, %v318
          %v320 = vrot.slane %v319, 1
          %v321 = vadd.f32 %v319, %v320
          %s322 = vtos %v321
          %v323 = vstv %s322
          %324 = vst [vmem:[%s274] sm:$0x1] %v323
          %v325 = vld [vmem:[#allocation3] sm:$0xff]
          %v326 = vsel %vm290, %v325, 0.0
          %327 = vadd.xlane.f32.xlu0 %v326
          %v328 = vpop.xlane.xlu0 %327
          %v329 = vrot.slane %v328, 4
          %v330 = vadd.f32 %v328, %v329
          %v331 = vrot.slane %v330, 2
          %v332 = vadd.f32 %v330, %v331
          %v333 = vrot.slane %v332, 1
          %v334 = vadd.f32 %v332, %v333
          %s335 = vtos %v334
          %v336 = vstv %s335
          %337 = vst [vmem:[%s274 + $0x1] sm:$0x1] %v336
          %v338 = vld [vmem:[#allocation4] sm:$0xff]
          %v339 = vsel %vm290, %v338, 0.0
          %340 = vadd.xlane.f32.xlu0 %v339
          %v341 = vpop.xlane.xlu0 %340
          %v342 = vrot.slane %v341, 4
          %v343 = vadd.f32 %v341, %v342
          %v344 = vrot.slane %v343, 2
          %v345 = vadd.f32 %v343, %v344
          %v346 = vrot.slane %v345, 1
          %v347 = vadd.f32 %v345, %v346
          %s348 = vtos %v347
          %v349 = vstv %s348
          %350 = vst [vmem:[%s274 + $0x2] sm:$0x1] %v349
        $region112: #{weight_dice_loss.2} parent=95 // pred_fallthru
          _
        %p351 = scmp.lt.s32.totalorder %s18, 1
        %s352 = scalar_select %p351, %s18, 1
        %s353 = smul.addr %s352, 4
        %s354 = scalar_lea.vmem %s2, %s353
        // Predicated region
        $region113: #{weight_dice_loss.2} parent=95 // pred_check
          %p355 = pneg %p110
        $region114: #{weight_dice_loss.2} parent=95 // pred_check_branch
          %357 = sbr.rel (%p355) target = $region116
        $region115: #{weight_dice_loss.2} parent=95 // pred_region
          _
        $region116: #{weight_dice_loss.2} parent=95 // pred_fallthru
          _
      $region96: #{weight_dice_loss.2} parent=5 // pred_fallthru
        _
      %p358 = scmp.le.s32.totalorder 2, %s8
      // Predicated region
      $region117: #{weight_dice_loss.2} parent=5 // pred_check
        %p359 = pneg %p358
      $region118: #{weight_dice_loss.2} parent=5 // pred_check_branch
        %361 = sbr.rel (%p359) target = $region120
      $region119: #{weight_dice_loss.2} parent=5 // pred_region
        %s362 = ssub.s32 %s8, 2
        // Predicated region
        $region121: #{weight_dice_loss.2} parent=119 // pred_check
          %p363 = pneg %p116
        $region122: #{weight_dice_loss.2} parent=119 // pred_check_branch
          %365 = sbr.rel (%p363) target = $region124
        $region123: #{weight_dice_loss.2} parent=119 // pred_region
          %p366 = scmp.lt.s32.totalorder %s21, 1
          %s367 = scalar_select %p366, %s21, 1
          %s368 = smul.addr %s367, 4
          %s369 = scalar_lea.vmem %s2, %s368
        $region124: #{weight_dice_loss.2} parent=119 // pred_fallthru
          _
      $region120: #{weight_dice_loss.2} parent=5 // pred_fallthru
        _
    $region6: #{weight_dice_loss.2} parent=1 // loop_footer
      %s12 = sadd.s32 1, %s8
    $region7: #{weight_dice_loss.2} parent=1 // loop_footer_branch
      %7 = sbr.rel target = $region3
    $region8: #{weight_dice_loss.2} parent=1 // loop_exit
      _

// kernel: weight_dice_loss.3
$region0: #{weight_dice_loss.3}
  #allocation0 [shape = 'u32[]', space=smem, size = 0x4, offset = 0x4, fixed_abs, tag = 'smem constant byte address 0x4 - core index']
  #allocation1 [shape = 'u32[144,128]{1,0:T(1,128)}', space=vmem, size = 0x12000, scoped, tag = 'internal scratch']
  #allocation2 [shape = 'f32[8,32]{1,0:T(8,128)}', space=vmem, size = 0x1000, scoped, tag = 'scratch operand']
  %s0 = inlined_call_operand.vmem [shape: f32[2,4,8,32], index: 0, kind: input, shape index: {}]
  %s1 = inlined_call_operand.vmem [shape: f32[2,1,128], index: 1, kind: output, shape index: {}]
  %s2 = sld [smem:[#allocation0]]
  $region83: #{weight_dice_loss.3} parent=0
    _
  %s4 = ssub.s32 1, %s2
  %s5 = scalar_select 0, %s4, %s2
  $region1: #{weight_dice_loss.3} parent=0
    #allocation3 [shape = 'u8[16384]{0}', space=vmem, size = 0x4000, scoped, tag = 'input window, operand 0']
    loop: start=0, step=1, limit=4
    $region2: #{weight_dice_loss.3} parent=1 // loop_pre_header
      _
    $region3: #{weight_dice_loss.3} parent=1 // loop_header
      %s7 = sphi 0, %s11
      %p8 = scmp.ge.s32.totalorder %s7, 4
      %s14 = sphi 0, %s33
      %s15 = sphi 0, %s29
      %s16 = sphi 0, %s25
      %s17 = sphi 0, %s14
      %s18 = sphi 0, %s15
      %s19 = sphi 0, %s16
      %s20 = sphi 0, %s17
      %s21 = sphi 0, %s18
      %s22 = sphi 0, %s19
      %s42 = sphi 0, %s44
      %s45 = sphi 0, %s42
      %s46 = sphi 0, %s45
      %s62 = sphi 0, %s46
      %s68 = sphi 0, %s70
      %s71 = sphi 0, %s68
      %s72 = sphi 0, %s71
      %s88 = sphi 0, %s72
    $region4: #{weight_dice_loss.3} parent=1 // loop_header_branch
      %10 = sbr.rel (%p8) target = $region8
    $region5: #{weight_dice_loss.3} parent=1 // loop_body
      %s12 = ssub.s32 %s7, 1
      %s13 = ssub.s32 %s7, 2
      %s23 = sadd.s32 1, %s16
      %p24 = scmp.ge.s32.totalorder %s23, 1
      %s25 = scalar_select %p24, 0, %s23
      %s26 = sadd.s32 1, %s15
      %s27 = scalar_select %p24, %s26, %s15
      %p28 = scmp.ge.s32.totalorder %s27, 1
      %s29 = scalar_select %p28, 0, %s27
      %s30 = sadd.s32 1, %s14
      %s31 = scalar_select %p28, %s30, %s14
      %p32 = scmp.ge.s32.totalorder %s31, 2
      %s33 = scalar_select %p32, 0, %s31
      %s34 = sadd.s32 %s14, 2
      %s35 = sadd.s32 %s33, 2
      %s36 = ssub.s32 %s15, %s29
      %s37 = ssub.s32 %s34, %s35
      %s38 = sor.u32 %s36, %s37
      %s39 = ssub.s32 %s16, %s25
      %s40 = sor.u32 %s38, %s39
      %p41 = scmp.eq.s32.totalorder %s40, 0
      %s43 = sadd.s32 %s42, 1
      %s44 = scalar_select %p41, %s42, %s43
      %p47 = pneg %p41
      %p48 = scmp.eq.s32.totalorder %s7, 1
      %p49 = por %p47, %p48
      %p50 = scmp.ne.s32.totalorder %s42, %s45
      %p51 = scmp.eq.s32.totalorder %s7, 0
      %p52 = por %p50, %p51
      %p53 = scmp.ne.s32.totalorder %s42, %s45
      %p54 = scmp.eq.s32.totalorder %s12, 1
      %p55 = por %p53, %p54
      %p56 = scmp.ne.s32.totalorder %s45, %s46
      %p57 = scmp.eq.s32.totalorder %s12, 0
      %p58 = por %p56, %p57
      %p59 = scmp.ne.s32.totalorder %s45, %s46
      %p60 = scmp.eq.s32.totalorder %s13, 1
      %p61 = por %p59, %p60
      %p63 = scmp.ne.s32.totalorder %s46, %s62
      %p64 = scmp.eq.s32.totalorder %s13, 0
      %p65 = por %p63, %p64
      %s66 = ssub.s32 %s14, %s33
      %p67 = scmp.eq.s32.totalorder %s66, 0
      %s69 = sadd.s32 %s68, 1
      %s70 = scalar_select %p67, %s68, %s69
      %p73 = pneg %p67
      %p74 = scmp.eq.s32.totalorder %s7, 1
      %p75 = por %p73, %p74
      %p76 = scmp.ne.s32.totalorder %s68, %s71
      %p77 = scmp.eq.s32.totalorder %s7, 0
      %p78 = por %p76, %p77
      %p79 = scmp.ne.s32.totalorder %s68, %s71
      %p80 = scmp.eq.s32.totalorder %s12, 1
      %p81 = por %p79, %p80
      %p82 = scmp.ne.s32.totalorder %s71, %s72
      %p83 = scmp.eq.s32.totalorder %s12, 0
      %p84 = por %p82, %p83
      %p85 = scmp.ne.s32.totalorder %s71, %s72
      %p86 = scmp.eq.s32.totalorder %s13, 1
      %p87 = por %p85, %p86
      %p89 = scmp.ne.s32.totalorder %s72, %s88
      %p90 = scmp.eq.s32.totalorder %s13, 0
      %p91 = por %p89, %p90
      %p92 = scmp.le.s32.totalorder 1, %s7
      %p93 = scmp.lt.s32.totalorder %s7, 3
      %p94 = pnand %p92, %p93
      %p95 = pneg %p94
      // Predicated region
      $region9: #{weight_dice_loss.3} parent=5 // pred_check
        _
      $region10: #{weight_dice_loss.3} parent=5 // pred_check_branch
        %97 = sbr.rel (%p94) target = $region12
      $region11: #{weight_dice_loss.3} parent=5 // pred_region
        %s98 = ssub.s32 %s7, 1
      $region12: #{weight_dice_loss.3} parent=5 // pred_fallthru
        _
      %p99 = scmp.lt.s32.totalorder %s7, 2
      // Predicated region
      $region13: #{weight_dice_loss.3} parent=5 // pred_check
        %p100 = pneg %p99
      $region14: #{weight_dice_loss.3} parent=5 // pred_check_branch
        %102 = sbr.rel (%p100) target = $region16
      $region15: #{weight_dice_loss.3} parent=5 // pred_region
        // Predicated region
        $region17: #{weight_dice_loss.3} parent=15 // pred_check
          %p103 = pneg %p52
        $region18: #{weight_dice_loss.3} parent=15 // pred_check_branch
          %105 = sbr.rel (%p103) target = $region20
        $region19: #{weight_dice_loss.3} parent=15 // pred_region
          %s106 = sand.u32 %s42, 1
          %s107 = sand.u32 %s42, 1
          %s108 = smul.addr %s107, 16
          %s109 = scalar_lea.vmem [#allocation3], %s108
          %s110 = sadd.s32 %s14, 2
          %s111 = smul.u32 2, %s15
          %s112 = sadd.s32 %s16, %s110
          %s113 = smul.addr %s111, 4
          %s114 = sadd.s32 %s112, %s113
          %s115 = smul.addr %s114, 8
          %s116 = scalar_lea.vmem %s0, %s115
          // Predicated region
          $region21: #{weight_dice_loss.3} parent=19 // pred_check
            _
          $region22: #{weight_dice_loss.3} parent=19 // pred_check_branch
            %118 = sbr.rel (0) target = $region24
          $region23: #{weight_dice_loss.3} parent=19 // pred_region
            // Predicated region
            $region25: #{weight_dice_loss.3} parent=23 // pred_check
              _
            $region26: #{weight_dice_loss.3} parent=23 // pred_check_branch
              %120 = sbr.rel (0) target = $region28
            $region27: #{weight_dice_loss.3} parent=23 // pred_region
              // Predicated region
              $region40: #{weight_dice_loss.3} parent=27 // pred_check
                _
              $region41: #{weight_dice_loss.3} parent=27 // pred_check_branch
                %137 = sbr.rel (0) target = $region43
              $region42: #{weight_dice_loss.3} parent=27 // pred_region
                loop: start=0, step=1, limit=1
                $region44: #{weight_dice_loss.3} parent=42 // loop_pre_header
                  _
                $region45: #{weight_dice_loss.3} parent=42 // loop_header
                  %s139 = sphi 0, %s143
                  %p140 = scmp.ge.s32.totalorder %s139, 1
                  %s144 = sphi %s116, %s116
                  %s145 = sphi %s109, %s109
                $region46: #{weight_dice_loss.3} parent=42 // loop_header_branch
                  %142 = sbr.rel (%p140) target = $region50
                $region47: #{weight_dice_loss.3} parent=42 // loop_body
                  %v146 = vld [vmem:[%s144] sm:$0xff]
                  %147 = vst [vmem:[%s145] sm:$0xff] %v146
                  %v148 = vld [vmem:[%s144 + $0x20] sm:$0xff]
                  %149 = vst [vmem:[%s145 + $0x8] sm:$0xff] %v148
                $region48: #{weight_dice_loss.3} parent=42 // loop_footer
                  %s143 = sadd.s32 1, %s139
                $region49: #{weight_dice_loss.3} parent=42 // loop_footer_branch
                  %138 = sbr.rel target = $region45
                $region50: #{weight_dice_loss.3} parent=42 // loop_exit
                  _
              $region43: #{weight_dice_loss.3} parent=27 // pred_fallthru
                _
              // Predicated region
              $region51: #{weight_dice_loss.3} parent=27 // pred_check
                _
              $region52: #{weight_dice_loss.3} parent=27 // pred_check_branch
                %151 = sbr.rel target = $region54
              $region53: #{weight_dice_loss.3} parent=27 // pred_region
                _
              $region54: #{weight_dice_loss.3} parent=27 // pred_fallthru
                _
            $region28: #{weight_dice_loss.3} parent=23 // pred_fallthru
              _
            // Predicated region
            $region29: #{weight_dice_loss.3} parent=23 // pred_check
              _
            $region30: #{weight_dice_loss.3} parent=23 // pred_check_branch
              %122 = sbr.rel target = $region32
            $region31: #{weight_dice_loss.3} parent=23 // pred_region
              loop: start=0, step=1, limit=1
              $region33: #{weight_dice_loss.3} parent=31 // loop_pre_header
                _
              $region34: #{weight_dice_loss.3} parent=31 // loop_header
                %s125 = sphi 0, %s129
                %p126 = scmp.ge.s32.totalorder %s125, 1
                %s130 = sphi %s116, %s116
                %s131 = sphi %s109, %s109
              $region35: #{weight_dice_loss.3} parent=31 // loop_header_branch
                %128 = sbr.rel (%p126) target = $region39
              $region36: #{weight_dice_loss.3} parent=31 // loop_body
                %v132 = vld [vmem:[%s130] sm:$0xff]
                %133 = vst [vmem:[%s131] sm:$0xff] %v132
                %v134 = vld [vmem:[%s130 + $0x20] sm:$0xff]
                %135 = vst [vmem:[%s131 + $0x8] sm:$0xff] %v134
              $region37: #{weight_dice_loss.3} parent=31 // loop_footer
                %s129 = sadd.s32 1, %s125
              $region38: #{weight_dice_loss.3} parent=31 // loop_footer_branch
                %124 = sbr.rel target = $region34
              $region39: #{weight_dice_loss.3} parent=31 // loop_exit
                _
            $region32: #{weight_dice_loss.3} parent=23 // pred_fallthru
              _
          $region24: #{weight_dice_loss.3} parent=19 // pred_fallthru
            _
          %152 = vnop
        $region20: #{weight_dice_loss.3} parent=15 // pred_fallthru
          _
      $region16: #{weight_dice_loss.3} parent=5 // pred_fallthru
        _
      %p153 = scmp.le.s32.totalorder 1, %s7
      %p154 = scmp.lt.s32.totalorder %s7, 3
      %p155 = pnand %p153, %p154
      %p156 = pneg %p155
      // Predicated region
      $region55: #{weight_dice_loss.3} parent=5 // pred_check
        _
      $region56: #{weight_dice_loss.3} parent=5 // pred_check_branch
        %158 = sbr.rel (%p155) target = $region58
      $region57: #{weight_dice_loss.3} parent=5 // pred_region
        %s159 = ssub.s32 %s7, 1
        %s160 = sand.u32 %s45, 1
        %s161 = sand.u32 %s45, 1
        %s162 = smul.addr %s161, 16
        %s163 = scalar_lea.vmem [#allocation3], %s162
        // Predicated region
        $region59: #{weight_dice_loss.3} parent=57 // pred_check
          %p164 = pneg %p58
        $region60: #{weight_dice_loss.3} parent=57 // pred_check_branch
          %166 = sbr.rel (%p164) target = $region62
        $region61: #{weight_dice_loss.3} parent=57 // pred_region
          _
        $region62: #{weight_dice_loss.3} parent=57 // pred_fallthru
          _
        %s167 = sand.u32 %s45, 1
        %s168 = sand.u32 %s45, 1
        %s169 = smul.addr %s168, 16
        %s170 = scalar_lea.vmem [#allocation3], %s169
        %p171 = pneg %p58
        %p172 = pneg %p55
        %p173 = pneg %p84
        %p174 = pneg %p81
        %p175 = scmp.lt.s32.totalorder %s17, 1
        %s176 = scalar_select %p175, %s17, 1
        %s177 = scalar_lea.vmem %s1, %s176
        %s178 = sadd.s32 %s17, 2
        %s179 = smul.u32 2, %s18
        %p180 = scmp.lt.s32.totalorder %s17, 1
        %s181 = scalar_select %p180, %s17, 1
        %s182 = scalar_lea.vmem %s1, %s181
        %p183 = scmp.eq.s32.totalorder %s18, 0
        %p184 = scmp.eq.s32.totalorder %s19, 0
        %p185 = pnand %p183, %p184
        %p186 = pneg %p185
        // Predicated region
        $region63: #{weight_dice_loss.3} parent=57 // pred_check
          _
        $region64: #{weight_dice_loss.3} parent=57 // pred_check_branch
          %188 = sbr.rel (%p185) target = $region66
        $region65: #{weight_dice_loss.3} parent=57 // pred_region
          %vm189 = vcmask 261120
          %190 = vst.msk [vmem:[#allocation2] sm:$0xff] %vm189, 0.0
        $region66: #{weight_dice_loss.3} parent=57 // pred_fallthru
          _
        %v191 = vld [vmem:[%s163] sm:$0xff]
        %v192 = vld [vmem:[%s163 + $0x8] sm:$0xff]
        %v193 = vld [vmem:[#allocation2] sm:$0xff]
        %vm194 = vcmask 261120
        %v195 = vsel %vm194, %v191, 0.0
        %v196 = vsel %vm194, %v192, 0.0
        %v197 = vadd.f32 %v195, %v196
        %v198 = vadd.f32 %v193, %v197
        %199 = vst.msk [vmem:[#allocation2] sm:$0xff] %vm194, %v198
        // Predicated region
        $region67: #{weight_dice_loss.3} parent=57 // pred_check
          _
        $region68: #{weight_dice_loss.3} parent=57 // pred_check_branch
          %201 = sbr.rel (%p185) target = $region70
        $region69: #{weight_dice_loss.3} parent=57 // pred_region
          %v202 = vld [vmem:[#allocation2] sm:$0xff]
          %v203 = vsel %vm194, %v202, 0.0
          %204 = vadd.xlane.f32.xlu0 %v203
          %v205 = vpop.xlane.xlu0 %204
          %v206 = vrot.slane %v205, 4
          %v207 = vadd.f32 %v205, %v206
          %v208 = vrot.slane %v207, 2
          %v209 = vadd.f32 %v207, %v208
          %v210 = vrot.slane %v209, 1
          %v211 = vadd.f32 %v209, %v210
          %s212 = vtos %v211
          %v213 = vstv %s212
          %214 = vst [vmem:[%s182] sm:$0x1] %v213
        $region70: #{weight_dice_loss.3} parent=57 // pred_fallthru
          _
        %p215 = scmp.lt.s32.totalorder %s17, 1
        %s216 = scalar_select %p215, %s17, 1
        %s217 = scalar_lea.vmem %s1, %s216
        // Predicated region
        $region71: #{weight_dice_loss.3} parent=57 // pred_check
          %p218 = pneg %p81
        $region72: #{weight_dice_loss.3} parent=57 // pred_check_branch
          %220 = sbr.rel (%p218) target = $region74
        $region73: #{weight_dice_loss.3} parent=57 // pred_region
          _
        $region74: #{weight_dice_loss.3} parent=57 // pred_fallthru
          _
      $region58: #{weight_dice_loss.3} parent=5 // pred_fallthru
        _
      %p221 = scmp.le.s32.totalorder 2, %s7
      // Predicated region
      $region75: #{weight_dice_loss.3} parent=5 // pred_check
        %p222 = pneg %p221
      $region76: #{weight_dice_loss.3} parent=5 // pred_check_branch
        %224 = sbr.rel (%p222) target = $region78
      $region77: #{weight_dice_loss.3} parent=5 // pred_region
        %s225 = ssub.s32 %s7, 2
        // Predicated region
        $region79: #{weight_dice_loss.3} parent=77 // pred_check
          %p226 = pneg %p87
        $region80: #{weight_dice_loss.3} parent=77 // pred_check_branch
          %228 = sbr.rel (%p226) target = $region82
        $region81: #{weight_dice_loss.3} parent=77 // pred_region
          %p229 = scmp.lt.s32.totalorder %s20, 1
          %s230 = scalar_select %p229, %s20, 1
          %s231 = scalar_lea.vmem %s1, %s230
        $region82: #{weight_dice_loss.3} parent=77 // pred_fallthru
          _
      $region78: #{weight_dice_loss.3} parent=5 // pred_fallthru
        _
    $region6: #{weight_dice_loss.3} parent=1 // loop_footer
      %s11 = sadd.s32 1, %s7
    $region7: #{weight_dice_loss.3} parent=1 // loop_footer_branch
      %6 = sbr.rel target = $region3
    $region8: #{weight_dice_loss.3} parent=1 // loop_exit
      _

</llo_original>
